<compile_context>
chip_gen: v7x
topology: tpu7x:2x2x1
jax: 0.10.0
libtpu: 0.0.40
codegen_flags: <defaults>
</compile_context>

<pallas_src>
import functools
import math

import jax
import jax.numpy as jnp
from jax.experimental import pallas as pl
from jax.experimental.pallas import tpu as pltpu


def make_basis(ndims: int, max_seq_len: int) -> jnp.ndarray:
    """Replicates PositionalEncoding.__init__ buffer: shape (max_seq_len, 1, ndims), f32."""
    position = jnp.arange(max_seq_len, dtype=jnp.float32)[:, None]              # (L, 1)
    period_exp = -math.log(2 * max_seq_len) / ndims
    period = jnp.exp(jnp.arange(0, ndims, 2, dtype=jnp.float32) * period_exp)   # (ceil(D/2),)

    n_even = (ndims + 1) // 2        # sin columns (0::2)
    n_odd = ndims // 2               # cos columns (1::2); uses period[:-1] when ndims is odd

    sin_vals = jnp.sin(position * period[:n_even] * math.pi * 0.5)              # (L, n_even)
    cos_vals = jnp.cos(position * period[:n_odd] * math.pi * 0.5)               # (L, n_odd)

    basis = jnp.zeros((max_seq_len, ndims), dtype=jnp.float32)
    basis = basis.at[:, 0::2].set(sin_vals)
    basis = basis.at[:, 1::2].set(cos_vals)
    return basis[:, None, :]                                                    # (L, 1, D)


_MIB = 1024 * 1024


@functools.lru_cache(maxsize=1)
def _vmem_budgets() -> tuple[int, int]:
    """(scoped vmem limit to request, budget for the double-buffered streaming tiles)."""
    try:
        cap = int(pltpu.get_tpu_info().vmem_capacity_bytes)      # per-core physical VMEM
    except Exception:
        cap = 64 * _MIB                                          # conservative (v7x per-TC)
    cap = min(max(cap, 32 * _MIB), 128 * _MIB)
    # Stay well below per-core physical even if `cap` ever reports a chip total.
    scoped_limit = min(cap // 2, 48 * _MIB)        # v7x: 32 MiB, v5e/v6e: 48 MiB
    tile_budget = (scoped_limit * 3) // 4          # v7x: 24 MiB, v5e/v6e: 36 MiB
    return scoped_limit, tile_budget


def _round_up(a: int, m: int) -> int:
    return ((a + m - 1) // m) * m


def _choose_seq_tile(seq_len: int, row_bytes: int, align: int, tile_budget: int) -> int:
    """Rows per grid step: aim for exactly 2 steps (>= 2 so both v7x TCs stream); only go
    smaller when the double-buffered x/out/basis tiles exceed the VMEM tile budget."""
    if seq_len <= align:
        return seq_len                                   # toy case: one full block
    vmem_rows = max(align, (tile_budget // (2 * row_bytes)) // align * align)   # 2x buffers
    two_step_rows = _round_up((seq_len + 1) // 2, align)                        # ~2 grid steps
    return min(vmem_rows, two_step_rows)


def _pos_enc_kernel_2d(x_ref, basis_ref, o_ref, *, batch: int, d: int):
    # x_ref / o_ref: (ts, B*D) lane-dense blocks in x.dtype; basis_ref: (ts, D) f32.
    b = basis_ref[...]                                   # read the basis tile once
    for k in range(batch):                               # static per-batch slice adds
        sl = slice(k * d, (k + 1) * d)
        o_ref[:, sl] = (x_ref[:, sl].astype(jnp.float32) + b).astype(o_ref.dtype)


def _pos_enc_kernel_3d(x_ref, basis_ref, o_ref):
    # x_ref / o_ref: (ts, B, D); basis_ref: (ts, 1, D) f32 -> broadcast over the batch axis.
    o_ref[...] = (x_ref[...].astype(jnp.float32) + basis_ref[...]).astype(o_ref.dtype)


@functools.partial(jax.jit, donate_argnums=(0,))
def positional_encoding(x: jnp.ndarray, basis: jnp.ndarray) -> jnp.ndarray:
    """x: (S, B, D); basis: (max_seq_len, 1, D) float32. Returns x + basis[:S] (dtype of x).

    x is donated: its HBM buffer is reused for the output (input_output_aliases)."""
    S, B, D = x.shape
    scoped_limit, tile_budget = _vmem_budgets()
    align = max(8, 32 // x.dtype.itemsize)               # sublane alignment: 8 f32, 16 bf16
    row_bytes = 2 * B * D * x.dtype.itemsize + D * 4     # x + out (+ f32 basis) per seq row
    ts = _choose_seq_tile(S, row_bytes, align, tile_budget)
    grid = (pl.cdiv(S, ts),)

    cparams = pltpu.CompilerParams(
        dimension_semantics=("parallel",),               # shard seq tiles across v7x's 2 TCs
        vmem_limit_bytes=scoped_limit,
    )

    if (B * D) % 128 == 0:
        # Lane-dense layout: (S, B*D) so the output path uses full-lane stores.
        x2d = x.reshape(S, B * D)                        # contiguous -> free reshape
        basis_s = basis[:S, 0, :].astype(jnp.float32)    # (S, D) f32, un-replicated
        out2d = pl.pallas_call(
            functools.partial(_pos_enc_kernel_2d, batch=B, d=D),
            out_shape=jax.ShapeDtypeStruct((S, B * D), x.dtype),
            grid_spec=pltpu.PrefetchScalarGridSpec(
                num_scalar_prefetch=0,
                grid=grid,
                in_specs=[
                    pl.BlockSpec((ts, B * D), lambda i: (i, 0)),   # x tile (lane-dense)
                    pl.BlockSpec((ts, D), lambda i: (i, 0)),       # basis tile (tiny, f32)
                ],
                out_specs=pl.BlockSpec((ts, B * D), lambda i: (i, 0)),
            ),
            input_output_aliases={0: 0},                 # out reuses x's (donated) buffer
            compiler_params=cparams,
        )(x2d, basis_s)
        return out2d.reshape(S, B, D)

    # Fallback (B*D not a multiple of 128, e.g. toy shapes): 3-D blocks with full trailing
    # dims -- natural broadcast over the batch axis, no replicated basis materialized.
    basis_s = basis[:S].astype(jnp.float32)              # (S, 1, D) f32
    return pl.pallas_call(
        _pos_enc_kernel_3d,
        out_shape=jax.ShapeDtypeStruct((S, B, D), x.dtype),
        grid_spec=pltpu.PrefetchScalarGridSpec(
            num_scalar_prefetch=0,
            grid=grid,
            in_specs=[
                pl.BlockSpec((ts, B, D), lambda i: (i, 0, 0)),
                pl.BlockSpec((ts, 1, D), lambda i: (i, 0, 0)),
            ],
            out_specs=pl.BlockSpec((ts, B, D), lambda i: (i, 0, 0)),
        ),
        input_output_aliases={0: 0},
        compiler_params=cparams,
    )(x, basis_s)


if __name__ == "__main__":
    key = jax.random.PRNGKey(0)
    k1, k2 = jax.random.split(key)

    # 1) Small demo shape matching the module spec (B*D = 64 -> 3-D fallback path).
    #    References are computed BEFORE each call because x is donated (buffer reused).
    ndims, max_seq_len, seq, batch = 32, 16, 8, 2
    basis = make_basis(ndims, max_seq_len)
    x = jax.random.normal(k1, (seq, batch, ndims), dtype=jnp.float32)
    ref = x + basis[:seq]
    out = jax.block_until_ready(positional_encoding(x, basis))
    assert out.shape == (seq, batch, ndims)
    assert jnp.allclose(out, ref, atol=1e-6), "mismatch vs reference (small f32)"

    # 2) Larger shape: lane-dense path (B*D = 256), exactly 2 grid steps
    #    (S=200 -> ts=104) with a partial trailing block.
    ndims2, max_seq_len2, seq2, batch2 = 64, 256, 200, 4
    basis2 = make_basis(ndims2, max_seq_len2)
    x2 = jax.random.normal(k2, (seq2, batch2, ndims2), dtype=jnp.float32)
    x3 = x2.astype(jnp.bfloat16)          # make the bf16 copy before x2 is donated
    ref2 = x2 + basis2[:seq2]
    out2 = jax.block_until_ready(positional_encoding(x2, basis2))
    assert jnp.allclose(out2, ref2, atol=1e-6), "mismatch vs reference (tiled f32)"

    # 3) bf16 activations: f32 basis, f32 add in-kernel, cast only on the store.
    ref3 = (x3.astype(jnp.float32) + basis2[:seq2]).astype(jnp.bfloat16)
    out3 = jax.block_until_ready(positional_encoding(x3, basis2))
    assert out3.dtype == jnp.bfloat16
    assert jnp.allclose(out3.astype(jnp.float32), ref3.astype(jnp.float32),
                        atol=1e-2, rtol=1e-2), "mismatch vs reference (bf16)"

    print("KERNEL_OK")
</pallas_src>

<mosaic_0001>
module attributes {stable_mosaic.version = 11 : i64} {
  func.func @_pos_enc_kernel_3d(%arg0: i32, %arg1: memref<8x2x32xf32, #tpu.memory_space<vmem>>, %arg2: memref<8x1x32xf32, #tpu.memory_space<vmem>>, %arg3: memref<8x2x32xf32, #tpu.memory_space<vmem>>) attributes {dimension_semantics = [#tpu.dimension_semantics<parallel>], iteration_bounds = array<i64: 1>, scalar_prefetch = 0 : i64, scratch_operands = 0 : i64, tpu.core_type = #tpu.core_type<tc>, window_params = [{transform_indices = @transform_0, window_bounds = array<i64: 8, 2, 32>}, {transform_indices = @transform_1, window_bounds = array<i64: 8, 1, 32>}, {transform_indices = @transform_2, window_bounds = array<i64: 8, 2, 32>}]} {
    %c0 = arith.constant 0 : index
    %c0_0 = arith.constant 0 : index
    %c0_1 = arith.constant 0 : index
    %0 = vector.load %arg1[%c0, %c0_0, %c0_1] : memref<8x2x32xf32, #tpu.memory_space<vmem>>, vector<8x2x32xf32>
    %c0_2 = arith.constant 0 : index
    %c0_3 = arith.constant 0 : index
    %c0_4 = arith.constant 0 : index
    %1 = vector.load %arg2[%c0_2, %c0_3, %c0_4] : memref<8x1x32xf32, #tpu.memory_space<vmem>>, vector<8x1x32xf32>
    %2 = vector.broadcast %1 : vector<8x1x32xf32> to vector<8x2x32xf32>
    %3 = arith.addf %0, %2 : vector<8x2x32xf32>
    %c0_5 = arith.constant 0 : index
    %c0_6 = arith.constant 0 : index
    %c0_7 = arith.constant 0 : index
    %4 = vector.load %arg3[%c0_5, %c0_6, %c0_7] : memref<8x2x32xf32, #tpu.memory_space<vmem>>, vector<8x2x32xf32>
    tpu.vector_store %arg3[%c0_5, %c0_6, %c0_7], %3 {strides = array<i32>} : memref<8x2x32xf32, #tpu.memory_space<vmem>>, vector<8x2x32xf32>,
    return
  }
  func.func @transform_0(%arg0: i32) -> (i32, i32, i32) {
    %c0_i32 = arith.constant 0 : i32
    %c0_i32_0 = arith.constant 0 : i32
    %c0_i32_1 = arith.constant 0 : i32
    return %arg0, %c0_i32, %c0_i32_0 : i32, i32, i32
  }
  func.func @transform_1(%arg0: i32) -> (i32, i32, i32) {
    %c0_i32 = arith.constant 0 : i32
    %c0_i32_0 = arith.constant 0 : i32
    %c0_i32_1 = arith.constant 0 : i32
    return %arg0, %c0_i32, %c0_i32_0 : i32, i32, i32
  }
  func.func @transform_2(%arg0: i32) -> (i32, i32, i32) {
    %c0_i32 = arith.constant 0 : i32
    %c0_i32_0 = arith.constant 0 : i32
    %c0_i32_1 = arith.constant 0 : i32
    return %arg0, %c0_i32, %c0_i32_0 : i32, i32, i32
  }
}

</mosaic_0001>

<llo_original>
// kernel: positional_encoding.1
$region0: #{positional_encoding.1}
  #allocation0 [shape = 'u32[]', space=smem, size = 0x4, offset = 0x4, fixed_abs, tag = 'smem constant byte address 0x4 - core index']
  #allocation1 [shape = 'u32[144,128]{1,0:T(1,128)}', space=vmem, size = 0x12000, scoped, tag = 'internal scratch']
  %s0 = inlined_call_operand.hbm [shape: f32[8,2,32], index: 0, kind: input, shape index: {}, may-alias: {0,2}]
  %s1 = inlined_call_operand.vmem [shape: f32[8,1,32], index: 1, kind: input, shape index: {}]
  %s2 = inlined_call_operand.hbm [shape: f32[8,2,32], index: 2, kind: output, shape index: {}, may-alias: {0,2}]
  %s3 = sld [smem:[#allocation0]]
  $region22: #{positional_encoding.1} parent=0
    _
  %s5 = ssub.s32 1, %s3
  %s6 = scalar_select 0, %s5, %s3
  $region1: #{positional_encoding.1} parent=0
    #allocation2 [shape = 'u8[8192]{0}', space=vmem, size = 0x2000, scoped, tag = 'input window, operand 0, single buffered']
    #allocation3 [shape = 's32[1]{0}', space=sflag, size = 0x4, scoped, tag = 'scoped memory for positional_encoding.1']
    #allocation4 [shape = 's32[1]{0}', space=sflag, size = 0x4, scoped, tag = 'scoped memory for positional_encoding.1']
    #allocation5 [shape = 'u8[8192]{0}', space=vmem, size = 0x2000, scoped, tag = 'output window, operand 0, single buffered']
    %7 = vsyncpa [#allocation3], 0
    %8 = vsyncpa [#allocation4], 0
    // Predicated region
    $region2: #{positional_encoding.1} parent=1 // pred_check
      _
    $region3: #{positional_encoding.1} parent=1 // pred_check_branch
      %10 = sbr.rel (0) target = $region5
    $region4: #{positional_encoding.1} parent=1 // pred_region
      %s12 = ssub.s32 256, 256
      %13 = vsyncadd [#allocation3], %s12
      %s14 = sshll.u32 [#allocation2], 4
      %s15 = int_to_ptr.vmem [resolvable:$true] %s14
      %20 = dma.hbm_to_vmem [thread:$0]  %s0, 256, %s15, [#allocation3], 32, 32, 2
    $region5: #{positional_encoding.1} parent=1 // pred_fallthru
      _
    // Predicated region
    $region6: #{positional_encoding.1} parent=1 // pred_check
      _
    $region7: #{positional_encoding.1} parent=1 // pred_check_branch
      %22 = sbr.rel (0) target = $region9
    $region8: #{positional_encoding.1} parent=1 // pred_region
      _
    $region9: #{positional_encoding.1} parent=1 // pred_fallthru
      _
    // Predicated region
    $region10: #{positional_encoding.1} parent=1 // pred_check
      _
    $region11: #{positional_encoding.1} parent=1 // pred_check_branch
      %24 = sbr.rel (0) target = $region13
    $region12: #{positional_encoding.1} parent=1 // pred_region
      %25 = dma.done [#allocation3], 256
    $region13: #{positional_encoding.1} parent=1 // pred_fallthru
      _
    %v26 = vld [vmem:[#allocation2] sm:$0x3]
    %v27 = vld [vmem:[#allocation2 + $0x2] sm:$0x3]
    %v28 = vld [vmem:[#allocation2 + $0x4] sm:$0x3]
    %v29 = vld [vmem:[#allocation2 + $0x6] sm:$0x3]
    %v30 = vld [vmem:[#allocation2 + $0x8] sm:$0x3]
    %v31 = vld [vmem:[#allocation2 + $0xa] sm:$0x3]
    %v32 = vld [vmem:[#allocation2 + $0xc] sm:$0x3]
    %v33 = vld [vmem:[#allocation2 + $0xe] sm:$0x3]
    %v34 = vld [vmem:[%s1] sm:$0x1]
    %v35 = vld [vmem:[%s1 + $0x1] sm:$0x1]
    %v36 = vld [vmem:[%s1 + $0x2] sm:$0x1]
    %v37 = vld [vmem:[%s1 + $0x3] sm:$0x1]
    %v38 = vld [vmem:[%s1 + $0x4] sm:$0x1]
    %v39 = vld [vmem:[%s1 + $0x5] sm:$0x1]
    %v40 = vld [vmem:[%s1 + $0x6] sm:$0x1]
    %v41 = vld [vmem:[%s1 + $0x7] sm:$0x1]
    %v50 = vlaneseq
    %v51 = vshrl.u32 %v50, 7
    %v52 = vsub.s32 0, %v51
    %v53 = vrot.slane %v34, %v52
    %v54 = vlaneseq
    %v55 = vshrl.u32 %v54, 7
    %v56 = vsub.s32 0, %v55
    %v57 = vrot.slane %v35, %v56
    %v58 = vlaneseq
    %v59 = vshrl.u32 %v58, 7
    %v60 = vsub.s32 0, %v59
    %v61 = vrot.slane %v36, %v60
    %v62 = vlaneseq
    %v63 = vshrl.u32 %v62, 7
    %v64 = vsub.s32 0, %v63
    %v65 = vrot.slane %v37, %v64
    %v66 = vlaneseq
    %v67 = vshrl.u32 %v66, 7
    %v68 = vsub.s32 0, %v67
    %v69 = vrot.slane %v38, %v68
    %v70 = vlaneseq
    %v71 = vshrl.u32 %v70, 7
    %v72 = vsub.s32 0, %v71
    %v73 = vrot.slane %v39, %v72
    %v74 = vlaneseq
    %v75 = vshrl.u32 %v74, 7
    %v76 = vsub.s32 0, %v75
    %v77 = vrot.slane %v40, %v76
    %v78 = vlaneseq
    %v79 = vshrl.u32 %v78, 7
    %v80 = vsub.s32 0, %v79
    %v81 = vrot.slane %v41, %v80
    %v90 = vadd.f32 %v26, %v53
    %v91 = vadd.f32 %v27, %v57
    %v92 = vadd.f32 %v28, %v61
    %v93 = vadd.f32 %v29, %v65
    %v94 = vadd.f32 %v30, %v69
    %v95 = vadd.f32 %v31, %v73
    %v96 = vadd.f32 %v32, %v77
    %v97 = vadd.f32 %v33, %v81
    %vm98 = vcmask 254976
    %99 = vst.msk [vmem:[#allocation5] sm:$0x3] %vm98, %v90
    %100 = vst.msk [vmem:[#allocation5 + $0x2] sm:$0x3] %vm98, %v91
    %101 = vst.msk [vmem:[#allocation5 + $0x4] sm:$0x3] %vm98, %v92
    %102 = vst.msk [vmem:[#allocation5 + $0x6] sm:$0x3] %vm98, %v93
    %103 = vst.msk [vmem:[#allocation5 + $0x8] sm:$0x3] %vm98, %v94
    %104 = vst.msk [vmem:[#allocation5 + $0xa] sm:$0x3] %vm98, %v95
    %105 = vst.msk [vmem:[#allocation5 + $0xc] sm:$0x3] %vm98, %v96
    %106 = vst.msk [vmem:[#allocation5 + $0xe] sm:$0x3] %vm98, %v97
    // Predicated region
    $region14: #{positional_encoding.1} parent=1 // pred_check
      _
    $region15: #{positional_encoding.1} parent=1 // pred_check_branch
      %108 = sbr.rel (0) target = $region17
    $region16: #{positional_encoding.1} parent=1 // pred_region
      %s110 = ssub.s32 256, 256
      %111 = vsyncadd [#allocation4], %s110
      %s112 = sshll.u32 [#allocation5], 4
      %s113 = int_to_ptr.vmem [resolvable:$true] %s112
      %118 = dma.vmem_to_hbm [thread:$0]  %s113, 256, %s2, [#allocation4], 32, 32, 2
    $region17: #{positional_encoding.1} parent=1 // pred_fallthru
      _
    // Predicated region
    $region18: #{positional_encoding.1} parent=1 // pred_check
      _
    $region19: #{positional_encoding.1} parent=1 // pred_check_branch
      %120 = sbr.rel (0) target = $region21
    $region20: #{positional_encoding.1} parent=1 // pred_region
      %121 = dma.done [#allocation4], 256
    $region21: #{positional_encoding.1} parent=1 // pred_fallthru
      _
    %122 = vsyncpa [#allocation3], 1
    %123 = vsyncpa [#allocation4], 1

</llo_original>
